<compile_context>
chip_gen: v7x
topology: tpu7x:2x2x1
jax: 0.10.0
libtpu: 0.0.40
codegen_flags: <defaults>
</compile_context>

<pallas_src>
import jax
import jax.numpy as jnp
from jax.experimental import pallas as pl
from jax.experimental.pallas import tpu as pltpu

CIN = 2
COUT = 10
K = 3                      # kernel_size
COUT_PAD = 16              # pad output channels to a full sublane tile
KKC = K * K * CIN          # 18 patch rows
KKC1 = KKC + 1             # +1 ones-row for the fused bias -> 19


def _conv_kernel(w_ref, p_ref, o_ref):
    # w_ref: (COUT_PAD, KKC1)  weights, bias folded in as last column,
    #                          rows 10..15 zero-padded.
    # p_ref: (KKC1, N*H*W)     im2col patches, last row = ones (bias).
    # o_ref: (COUT_PAD, N*H*W) full-plane flattened output (lane-dense).
    o_ref[...] = jnp.dot(w_ref[...], p_ref[...],
                         preferred_element_type=jnp.float32)


def conv2d_bias_no_padding(x, weight, bias):
    """x: (N, CIN, H, W) f32, weight: (COUT, CIN, K, K) f32, bias: (COUT,) f32
    -> (N, COUT, H-2, W-2) f32 (valid conv, stride 1, with bias)."""
    n, cin, h, w = x.shape
    assert cin == CIN and weight.shape == (COUT, CIN, K, K)
    assert bias.shape == (COUT,)
    oh, ow = h - K + 1, w - K + 1
    hw = h * w

    # ---- wrapper-side im2col (layout plumbing handled by XLA) -------------
    # Pad the flattened image so every (kh*W + kw) shifted window stays in
    # bounds; positions past the valid (OH, OW) window read into the pad /
    # next row and are discarded by the final slice.
    max_shift = (K - 1) * w + (K - 1)
    x_flat = jnp.pad(x.reshape(n, CIN, hw), ((0, 0), (0, 0), (0, max_shift)))
    rows = []
    for kh in range(K):
        for kw in range(K):
            s = kh * w + kw
            rows.append(jax.lax.slice_in_dim(x_flat, s, s + hw, axis=2))
    patches = jnp.concatenate(rows, axis=1)                      # (n, KKC, hw)
    ones = jnp.ones((n, 1, hw), jnp.float32)
    patches = jnp.concatenate([patches, ones], axis=1)           # (n, KKC1, hw)
    # Fold batch into the lane dimension -> (KKC1, n*hw); n*hw = 512 lanes.
    patches = jnp.transpose(patches, (1, 0, 2)).reshape(KKC1, n * hw)

    # Weight layout matching the patch-row order ((kh, kw) outer, ci inner),
    # bias folded in as a trailing column, COUT zero-padded to 16 rows.
    w2 = jnp.transpose(weight, (0, 2, 3, 1)).reshape(COUT, KKC)
    w2 = jnp.concatenate([w2, bias.reshape(COUT, 1)], axis=1)    # (COUT, KKC1)
    w2 = jnp.pad(w2, ((0, COUT_PAD - COUT), (0, 0)))             # (16, KKC1)

    cost = pl.CostEstimate(
        flops=2 * COUT_PAD * KKC1 * n * hw,
        transcendentals=0,
        bytes_accessed=4 * (w2.size + patches.size + COUT_PAD * n * hw))

    out_flat = pl.pallas_call(
        _conv_kernel,
        out_shape=jax.ShapeDtypeStruct((COUT_PAD, n * hw), jnp.float32),
        grid=(1,),
        in_specs=[
            pl.BlockSpec((COUT_PAD, KKC1), lambda i: (0, 0)),
            pl.BlockSpec((KKC1, n * hw), lambda i: (0, 0)),
        ],
        out_specs=pl.BlockSpec((COUT_PAD, n * hw), lambda i: (0, 0)),
        compiler_params=pltpu.CompilerParams(
            dimension_semantics=("arbitrary",)),
        cost_estimate=cost,
    )(w2, patches)

    # Valid conv outputs are the top-left (oh, ow) corner of each full plane;
    # the padded output channels (rows 10..15) are dropped.
    out = out_flat.reshape(COUT_PAD, n, h, w)
    return jnp.transpose(out, (1, 0, 2, 3))[:, :COUT, :oh, :ow]


def _init_params(key):
    # Deterministic init mimicking PyTorch's default Conv2d init:
    # U(-1/sqrt(fan_in), 1/sqrt(fan_in)) for weight and bias, fan_in = 18.
    kw, kb = jax.random.split(key)
    bound = 1.0 / jnp.sqrt(jnp.float32(CIN * K * K))
    weight = jax.random.uniform(
        kw, (COUT, CIN, K, K), dtype=jnp.float32, minval=-bound, maxval=bound)
    bias = jax.random.uniform(
        kb, (COUT,), dtype=jnp.float32, minval=-bound, maxval=bound)
    return weight, bias


if __name__ == "__main__":
    key = jax.random.PRNGKey(0)
    kx, kp = jax.random.split(key)

    # Small shapes consistent with the module: N=2, Cin=2, H=W=16.
    x = jax.random.normal(kx, (2, CIN, 16, 16), dtype=jnp.float32)
    weight, bias = _init_params(kp)

    out = conv2d_bias_no_padding(x, weight, bias)
    out = jax.block_until_ready(out)

    # Reference: XLA conv (NCHW / OIHW, valid padding) + per-channel bias.
    ref = jax.lax.conv_general_dilated(
        x, weight, window_strides=(1, 1), padding="VALID",
        dimension_numbers=("NCHW", "OIHW", "NCHW"),
        precision=jax.lax.Precision.HIGHEST)
    ref = ref + bias[None, :, None, None]
    ref = jax.block_until_ready(ref)

    assert out.shape == (2, COUT, 14, 14), out.shape
    assert jnp.allclose(out, ref, atol=1e-4, rtol=1e-4), "mismatch vs reference conv"

    print("KERNEL_OK")
</pallas_src>

<mosaic_0001>
module attributes {stable_mosaic.version = 11 : i64} {
  func.func @_conv_kernel(%arg0: i32, %arg1: memref<16x19xf32, #tpu.memory_space<vmem>>, %arg2: memref<19x512xf32, #tpu.memory_space<vmem>>, %arg3: memref<16x512xf32, #tpu.memory_space<vmem>>) attributes {dimension_semantics = [#tpu.dimension_semantics<arbitrary>], iteration_bounds = array<i64: 1>, scalar_prefetch = 0 : i64, scratch_operands = 0 : i64, tpu.core_type = #tpu.core_type<tc>, window_params = [{pipeline_mode = #tpu.pipeline_mode<synchronous>, transform_indices = @transform_0, window_bounds = array<i64: 16, 19>}, {pipeline_mode = #tpu.pipeline_mode<synchronous>, transform_indices = @transform_1, window_bounds = array<i64: 19, 512>}, {pipeline_mode = #tpu.pipeline_mode<synchronous>, transform_indices = @transform_2, window_bounds = array<i64: 16, 512>}]} {
    %c0 = arith.constant 0 : index
    %c0_0 = arith.constant 0 : index
    %0 = vector.load %arg1[%c0, %c0_0] : memref<16x19xf32, #tpu.memory_space<vmem>>, vector<16x19xf32>
    %c0_1 = arith.constant 0 : index
    %c0_2 = arith.constant 0 : index
    %1 = vector.load %arg2[%c0_1, %c0_2] : memref<19x512xf32, #tpu.memory_space<vmem>>, vector<19x512xf32>
    %cst = arith.constant dense<0.000000e+00> : vector<16x512xf32>
    %2 = tpu.matmul %0, %1, %cst {dimension_numbers = #tpu.dot_dimension_numbers<[1], [0], [0], [1], [0, 0, 1, 1], [], []>} : vector<16x19xf32>, vector<19x512xf32>, vector<16x512xf32> -> vector<16x512xf32>
    %c0_3 = arith.constant 0 : index
    %c0_4 = arith.constant 0 : index
    %3 = vector.load %arg3[%c0_3, %c0_4] : memref<16x512xf32, #tpu.memory_space<vmem>>, vector<16x512xf32>
    tpu.vector_store %arg3[%c0_3, %c0_4], %2 {strides = array<i32>} : memref<16x512xf32, #tpu.memory_space<vmem>>, vector<16x512xf32>,
    return
  }
  func.func @transform_0(%arg0: i32) -> (i32, i32) {
    %c0_i32 = arith.constant 0 : i32
    %c0_i32_0 = arith.constant 0 : i32
    %c0_i32_1 = arith.constant 0 : i32
    return %c0_i32, %c0_i32_0 : i32, i32
  }
  func.func @transform_1(%arg0: i32) -> (i32, i32) {
    %c0_i32 = arith.constant 0 : i32
    %c0_i32_0 = arith.constant 0 : i32
    %c0_i32_1 = arith.constant 0 : i32
    return %c0_i32, %c0_i32_0 : i32, i32
  }
  func.func @transform_2(%arg0: i32) -> (i32, i32) {
    %c0_i32 = arith.constant 0 : i32
    %c0_i32_0 = arith.constant 0 : i32
    %c0_i32_1 = arith.constant 0 : i32
    return %c0_i32, %c0_i32_0 : i32, i32
  }
}

</mosaic_0001>

<llo_original>
// kernel: tpu_custom_call.1
$region0: #{tpu_custom_call.1}
  #allocation0 [shape = 'u32[]', space=smem, size = 0x4, offset = 0x4, fixed_abs, tag = 'smem constant byte address 0x4 - core index']
  #allocation1 [shape = 'u32[144,128]{1,0:T(1,128)}', space=vmem, size = 0x12000, scoped, tag = 'internal scratch']
  %s0 = inlined_call_operand.hbm [shape: f32[16,19], index: 0, kind: input, shape index: {}]
  %s1 = inlined_call_operand.hbm [shape: f32[19,512], index: 1, kind: input, shape index: {}]
  %s2 = inlined_call_operand.hbm [shape: f32[16,512], index: 2, kind: output, shape index: {}]
  %s3 = sld [smem:[#allocation0]]
  $region26: #{tpu_custom_call.1} parent=0
    _
  %s5 = ssub.s32 1, %s3
  %s6 = scalar_select 0, %s5, %s3
  $region1: #{tpu_custom_call.1} parent=0
    #allocation2 [shape = 'u8[8192]{0}', space=vmem, size = 0x2000, scoped, tag = 'input window, operand 0, single buffered']
    #allocation3 [shape = 's32[1]{0}', space=sflag, size = 0x4, scoped, tag = 'scoped memory for tpu_custom_call.1']
    #allocation4 [shape = 's32[1]{0}', space=sflag, size = 0x4, scoped, tag = 'scoped memory for tpu_custom_call.1']
    #allocation5 [shape = 'u8[49152]{0}', space=vmem, size = 0xc000, scoped, tag = 'input window, operand 1, single buffered']
    #allocation6 [shape = 's32[1]{0}', space=sflag, size = 0x4, scoped, tag = 'scoped memory for tpu_custom_call.1']
    #allocation7 [shape = 'u8[32768]{0}', space=vmem, size = 0x8000, scoped, tag = 'output window, operand 0, single buffered']
    %7 = vsyncpa [#allocation3], 0
    %8 = vsyncpa [#allocation6], 0
    %9 = vsyncpa [#allocation4], 0
    // Predicated region
    $region2: #{tpu_custom_call.1} parent=1 // pred_check
      _
    $region3: #{tpu_custom_call.1} parent=1 // pred_check_branch
      %11 = sbr.rel (0) target = $region5
    $region4: #{tpu_custom_call.1} parent=1 // pred_region
      %s13 = ssub.s32 256, 256
      %14 = vsyncadd [#allocation3], %s13
      %s15 = sshll.u32 [#allocation2], 4
      %s16 = int_to_ptr.vmem [resolvable:$true] %s15
      %21 = dma.hbm_to_vmem [thread:$0]  %s0, 256, %s16, [#allocation3], 128, 128, 8
    $region5: #{tpu_custom_call.1} parent=1 // pred_fallthru
      _
    // Predicated region
    $region6: #{tpu_custom_call.1} parent=1 // pred_check
      _
    $region7: #{tpu_custom_call.1} parent=1 // pred_check_branch
      %23 = sbr.rel (0) target = $region9
    $region8: #{tpu_custom_call.1} parent=1 // pred_region
      %s25 = ssub.s32 1536, 1536
      %26 = vsyncadd [#allocation6], %s25
      %s27 = sshll.u32 [#allocation5], 4
      %s28 = int_to_ptr.vmem [resolvable:$true] %s27
      %33 = dma.hbm_to_vmem [thread:$0]  %s1, 1536, %s28, [#allocation6], 512, 512, 32
    $region9: #{tpu_custom_call.1} parent=1 // pred_fallthru
      _
    // Predicated region
    $region10: #{tpu_custom_call.1} parent=1 // pred_check
      _
    $region11: #{tpu_custom_call.1} parent=1 // pred_check_branch
      %35 = sbr.rel (0) target = $region13
    $region12: #{tpu_custom_call.1} parent=1 // pred_region
      %36 = dma.done [#allocation3], 256
    $region13: #{tpu_custom_call.1} parent=1 // pred_fallthru
      _
    // Predicated region
    $region14: #{tpu_custom_call.1} parent=1 // pred_check
      _
    $region15: #{tpu_custom_call.1} parent=1 // pred_check_branch
      %38 = sbr.rel (0) target = $region17
    $region16: #{tpu_custom_call.1} parent=1 // pred_region
      %39 = dma.done [#allocation6], 1536
    $region17: #{tpu_custom_call.1} parent=1 // pred_fallthru
      _
    %v40 = vld [vmem:[#allocation2] sm:$0xff]
    %v41 = vld [vmem:[#allocation2 + $0x8] sm:$0xff]
    %v42 = vld [vmem:[#allocation5] sm:$0xff]
    %v43 = vld [vmem:[#allocation5 + $0x8] sm:$0xff]
    %v44 = vld [vmem:[#allocation5 + $0x10] sm:$0xff]
    %v45 = vld [vmem:[#allocation5 + $0x18] sm:$0xff]
    %v46 = vld [vmem:[#allocation5 + $0x20] sm:$0xff]
    %v47 = vld [vmem:[#allocation5 + $0x28] sm:$0xff]
    %v48 = vld [vmem:[#allocation5 + $0x30] sm:$0xff]
    %v49 = vld [vmem:[#allocation5 + $0x38] sm:$0xff]
    %v50 = vld [vmem:[#allocation5 + $0x40] sm:$0x7]
    %v51 = vld [vmem:[#allocation5 + $0x48] sm:$0x7]
    %v52 = vld [vmem:[#allocation5 + $0x50] sm:$0x7]
    %v53 = vld [vmem:[#allocation5 + $0x58] sm:$0x7]
    %vm54 = vcmask 154624
    %v56 = vsel %vm54, %v40, 0
    %v59 = vsel %vm54, %v41, 0
    %vm61 = vcmask 1042432
    %v63 = vsel %vm61, %v50, 0
    %v66 = vsel %vm61, %v51, 0
    %v69 = vsel %vm61, %v52, 0
    %v72 = vsel %vm61, %v53, 0
    %74 = vmatprep.subr.mxu0 %v43
    %75 = vmatpush1.msra.mxu0 %v42
    %76 = vmatprep.subr.mxu0 %v47
    %77 = vmatpush1.msra.mxu0 %v46
    %78 = vmatprep.subr.mxu0 %v66
    %79 = vmatpush1.msra.mxu0 %v63
    %80 = vmatprep.subr.mxu0 0.0
    %81 = vmatpush1.msra.mxu0 0.0
    %82 = vmatprep.subr.mxu0 0.0
    %83 = vmatpush1.msra.mxu0 0.0
    %84 = vmatprep.subr.mxu0 0.0
    %85 = vmatpush1.msra.mxu0 0.0
    %86 = vmatprep.subr.mxu0 0.0
    %87 = vmatpush1.msra.mxu0 0.0
    %88 = vmatprep.subr.mxu0 0.0
    %89 = vmatpush1.msra.mxu0 0.0
    %90 = vmatprep.subr.mxu0 0.0
    %91 = vmatpush1.msra.mxu0 0.0
    %92 = vmatprep.subr.mxu0 0.0
    %93 = vmatpush1.msra.mxu0 0.0
    %94 = vmatprep.subr.mxu0 0.0
    %95 = vmatpush1.msra.mxu0 0.0
    %96 = vmatprep.subr.mxu0 0.0
    %97 = vmatpush1.msra.mxu0 0.0
    %98 = vmatprep.subr.mxu0 0.0
    %99 = vmatpush1.msra.mxu0 0.0
    %100 = vmatprep.subr.mxu0 0.0
    %101 = vmatpush1.msra.mxu0 0.0
    %102 = vmatprep.subr.mxu0 0.0
    %103 = vmatpush1.msra.mxu0 0.0
    %104 = vmatprep.subr.mxu0 0.0
    %105 = vmatpush1.msra.mxu0 0.0
    %106 = vmatprep.subr.mxu0 0.0
    %107 = vmatpush1.msra.mxu0 0.0
    %108 = vmatprep.subr.mxu0 0.0
    %109 = vmatpush1.msra.mxu0 0.0
    %110 = vmatprep.subr.mxu0 0.0
    %111 = vmatpush1.msra.mxu0 0.0
    %112 = vmatprep.subr.mxu0 0.0
    %113 = vmatpush1.msra.mxu0 0.0
    %114 = vmatprep.subr.mxu0 0.0
    %115 = vmatpush1.msra.mxu0 0.0
    %116 = vmatprep.subr.mxu0 0.0
    %117 = vmatpush1.msra.mxu0 0.0
    %118 = vmatprep.subr.mxu0 0.0
    %119 = vmatpush1.msra.mxu0 0.0
    %120 = vmatprep.subr.mxu0 0.0
    %121 = vmatpush1.msra.mxu0 0.0
    %122 = vmatprep.subr.mxu0 0.0
    %123 = vmatpush1.msra.mxu0 0.0
    %124 = vmatprep.subr.mxu0 0.0
    %125 = vmatpush1.msra.mxu0 0.0
    %126 = vmatprep.subr.mxu0 0.0
    %127 = vmatpush1.msra.mxu0 0.0
    %128 = vmatprep.subr.mxu0 0.0
    %129 = vmatpush1.msra.mxu0 0.0
    %130 = vmatprep.subr.mxu0 0.0
    %131 = vmatpush1.msra.mxu0 0.0
    %132 = vmatprep.subr.mxu0 0.0
    %133 = vmatpush1.msra.mxu0 0.0
    %134 = vmatprep.subr.mxu0 0.0
    %135 = vmatpush1.msra.mxu0 0.0
    %136 = vmatprep.subr.mxu0 0.0
    %137 = vmatpush1.msra.mxu0 0.0
    %138 = vmatprep.mubr.f32.mxu0 0.0
    %139 = vmatmul.mubr.f32.gmra.mrb[0].mxu0 %v56
    %v140 = vpop.f32.mrb[0].mxu0
    %v141 = vadd.f32 0.0, %v140
    %v142 = vpop.f32.mrb[0].mxu0
    %v143 = vadd.f32 0.0, %v142
    %144 = vmatprep.mubr.f32.mxu0 0.0
    %145 = vmatmul.mubr.f32.gmra.mrb[0].mxu0 %v59
    %v146 = vpop.f32.mrb[0].mxu0
    %v147 = vadd.f32 0.0, %v146
    %v148 = vpop.f32.mrb[0].mxu0
    %v149 = vadd.f32 0.0, %v148
    %150 = vdwg.mxu0
    %151 = vmatprep.subr.mxu0 %v45
    %152 = vmatpush1.msra.mxu0 %v44
    %153 = vmatprep.subr.mxu0 %v49
    %154 = vmatpush1.msra.mxu0 %v48
    %155 = vmatprep.subr.mxu0 %v72
    %156 = vmatpush1.msra.mxu0 %v69
    %157 = vmatprep.subr.mxu0 0.0
    %158 = vmatpush1.msra.mxu0 0.0
    %159 = vmatprep.subr.mxu0 0.0
    %160 = vmatpush1.msra.mxu0 0.0
    %161 = vmatprep.subr.mxu0 0.0
    %162 = vmatpush1.msra.mxu0 0.0
    %163 = vmatprep.subr.mxu0 0.0
    %164 = vmatpush1.msra.mxu0 0.0
    %165 = vmatprep.subr.mxu0 0.0
    %166 = vmatpush1.msra.mxu0 0.0
    %167 = vmatprep.subr.mxu0 0.0
    %168 = vmatpush1.msra.mxu0 0.0
    %169 = vmatprep.subr.mxu0 0.0
    %170 = vmatpush1.msra.mxu0 0.0
    %171 = vmatprep.subr.mxu0 0.0
    %172 = vmatpush1.msra.mxu0 0.0
    %173 = vmatprep.subr.mxu0 0.0
    %174 = vmatpush1.msra.mxu0 0.0
    %175 = vmatprep.subr.mxu0 0.0
    %176 = vmatpush1.msra.mxu0 0.0
    %177 = vmatprep.subr.mxu0 0.0
    %178 = vmatpush1.msra.mxu0 0.0
    %179 = vmatprep.subr.mxu0 0.0
    %180 = vmatpush1.msra.mxu0 0.0
    %181 = vmatprep.subr.mxu0 0.0
    %182 = vmatpush1.msra.mxu0 0.0
    %183 = vmatprep.subr.mxu0 0.0
    %184 = vmatpush1.msra.mxu0 0.0
    %185 = vmatprep.subr.mxu0 0.0
    %186 = vmatpush1.msra.mxu0 0.0
    %187 = vmatprep.subr.mxu0 0.0
    %188 = vmatpush1.msra.mxu0 0.0
    %189 = vmatprep.subr.mxu0 0.0
    %190 = vmatpush1.msra.mxu0 0.0
    %191 = vmatprep.subr.mxu0 0.0
    %192 = vmatpush1.msra.mxu0 0.0
    %193 = vmatprep.subr.mxu0 0.0
    %194 = vmatpush1.msra.mxu0 0.0
    %195 = vmatprep.subr.mxu0 0.0
    %196 = vmatpush1.msra.mxu0 0.0
    %197 = vmatprep.subr.mxu0 0.0
    %198 = vmatpush1.msra.mxu0 0.0
    %199 = vmatprep.subr.mxu0 0.0
    %200 = vmatpush1.msra.mxu0 0.0
    %201 = vmatprep.subr.mxu0 0.0
    %202 = vmatpush1.msra.mxu0 0.0
    %203 = vmatprep.subr.mxu0 0.0
    %204 = vmatpush1.msra.mxu0 0.0
    %205 = vmatprep.subr.mxu0 0.0
    %206 = vmatpush1.msra.mxu0 0.0
    %207 = vmatprep.subr.mxu0 0.0
    %208 = vmatpush1.msra.mxu0 0.0
    %209 = vmatprep.subr.mxu0 0.0
    %210 = vmatpush1.msra.mxu0 0.0
    %211 = vmatprep.subr.mxu0 0.0
    %212 = vmatpush1.msra.mxu0 0.0
    %213 = vmatprep.subr.mxu0 0.0
    %214 = vmatpush1.msra.mxu0 0.0
    %215 = vmatprep.mubr.f32.mxu0 0.0
    %216 = vmatmul.mubr.f32.gmra.mrb[0].mxu0 %v56
    %v217 = vpop.f32.mrb[0].mxu0
    %v218 = vadd.f32 0.0, %v217
    %v219 = vpop.f32.mrb[0].mxu0
    %v220 = vadd.f32 0.0, %v219
    %221 = vmatprep.mubr.f32.mxu0 0.0
    %222 = vmatmul.mubr.f32.gmra.mrb[0].mxu0 %v59
    %v223 = vpop.f32.mrb[0].mxu0
    %v224 = vadd.f32 0.0, %v223
    %v225 = vpop.f32.mrb[0].mxu0
    %v226 = vadd.f32 0.0, %v225
    %227 = vdwg.mxu0
    %228 = vst [vmem:[#allocation7] sm:$0xff] %v141
    %229 = vst [vmem:[#allocation7 + $0x8] sm:$0xff] %v143
    %230 = vst [vmem:[#allocation7 + $0x10] sm:$0xff] %v218
    %231 = vst [vmem:[#allocation7 + $0x18] sm:$0xff] %v220
    %232 = vst [vmem:[#allocation7 + $0x20] sm:$0xff] %v147
    %233 = vst [vmem:[#allocation7 + $0x28] sm:$0xff] %v149
    %234 = vst [vmem:[#allocation7 + $0x30] sm:$0xff] %v224
    %235 = vst [vmem:[#allocation7 + $0x38] sm:$0xff] %v226
    // Predicated region
    $region18: #{tpu_custom_call.1} parent=1 // pred_check
      _
    $region19: #{tpu_custom_call.1} parent=1 // pred_check_branch
      %237 = sbr.rel (0) target = $region21
    $region20: #{tpu_custom_call.1} parent=1 // pred_region
      %s239 = ssub.s32 1024, 1024
      %240 = vsyncadd [#allocation4], %s239
      %s241 = sshll.u32 [#allocation7], 4
      %s242 = int_to_ptr.vmem [resolvable:$true] %s241
      %247 = dma.vmem_to_hbm [thread:$0]  %s242, 1024, %s2, [#allocation4], 512, 512, 32
    $region21: #{tpu_custom_call.1} parent=1 // pred_fallthru
      _
    // Predicated region
    $region22: #{tpu_custom_call.1} parent=1 // pred_check
      _
    $region23: #{tpu_custom_call.1} parent=1 // pred_check_branch
      %249 = sbr.rel (0) target = $region25
    $region24: #{tpu_custom_call.1} parent=1 // pred_region
      %250 = dma.done [#allocation4], 1024
    $region25: #{tpu_custom_call.1} parent=1 // pred_fallthru
      _
    %251 = vsyncpa [#allocation3], 1
    %252 = vsyncpa [#allocation6], 1
    %253 = vsyncpa [#allocation4], 1

</llo_original>
